<compile_context>
chip_gen: v7x
topology: tpu7x:2x2x1
jax: 0.10.0
libtpu: 0.0.40
codegen_flags: <defaults>
</compile_context>

<pallas_src>
import math

import jax
import jax.numpy as jnp
import numpy as np
from jax.experimental import pallas as pl
from jax.experimental.pallas import tpu as pltpu


def _round_up(v, m):
    return (v + m - 1) // m * m


def _largest_aligned_divisor(extent, desired, granule):
    """Largest multiple of `granule` that divides `extent` and is <= desired."""
    desired = min(desired, extent)
    best = granule
    d = granule
    while d <= desired:
        if extent % d == 0:
            best = d
        d += granule
    return best


def _pad_cast_2d(arr, rows, cols, dtype):
    """Cast and zero-pad a 2-D array; skips the copy when already aligned."""
    r, c = arr.shape
    arr = arr.astype(dtype)
    if (r, c) == (rows, cols):
        return arr
    return jnp.zeros((rows, cols), dtype).at[:r, :c].set(arr)


def quantize_weight(weight):
    """Mirror of QLoRALinear._quantize_weight: per-tensor symmetric 4-bit range."""
    abs_max = jnp.max(jnp.abs(weight))
    scale = abs_max / (2 ** (4 - 1) - 1)          # abs_max / 7
    q = jnp.clip(jnp.round(weight / scale), -8, 7).astype(jnp.int8)
    return q, scale


def prepare_qlora_params(q_weight, scale, bias, lora_A, lora_B, *, alpha, rank):
    """One-time prep of all constant operands (hoisted out of the forward).

    q_weight: int8 [N, K] (PyTorch Linear layout). Returns a dict holding the
    [K, N]-major padded int8 weight, padded fp32 bias, padded bf16 lora_A,
    padded bf16 (alpha/rank)*lora_B, the per-tensor scale, and dimensions.
    """
    N, K = q_weight.shape
    assert lora_A.shape == (K, rank) and lora_B.shape == (rank, N)
    assert bias.shape == (N,)

    Kp, Np = _round_up(K, 128), _round_up(N, 128)
    r_pad = _round_up(rank, 128)
    scaling = float(alpha) / float(rank)

    qw_t = _pad_cast_2d(q_weight.T, Kp, Np, jnp.int8)            # [K, N] major
    bias_p = _pad_cast_2d(bias.reshape(1, N), 1, Np, jnp.float32)
    a_p = _pad_cast_2d(lora_A, Kp, r_pad, jnp.bfloat16)
    b_p = _pad_cast_2d(lora_B * scaling, r_pad, Np, jnp.bfloat16)
    scale2d = jnp.reshape(scale, (1, 1)).astype(jnp.float32)

    return dict(qw_t=qw_t, bias=bias_p, lora_A=a_p, lora_B=b_p, scale=scale2d,
                N=N, K=K, Np=Np, Kp=Kp, rank=rank, r_pad=r_pad)


def _xa_kernel(x_ref, a_ref, xa_ref, acc_ref):
    # xa = x @ lora_A, K-tiled with an fp32 accumulator (VMEM footprint is
    # bounded by one (tm, tk) block of x -> generation-portable, incl. v7x).
    k = pl.program_id(1)

    @pl.when(k == 0)
    def _init():
        acc_ref[...] = jnp.zeros_like(acc_ref)

    acc_ref[...] += jnp.dot(x_ref[...], a_ref[...],
                            preferred_element_type=jnp.float32)

    @pl.when(k == pl.num_programs(1) - 1)
    def _finalize():
        xa_ref[...] = acc_ref[...].astype(xa_ref.dtype)


def _qlora_kernel(x_ref, qw_ref, scale_ref, bias_ref, xa_ref, b_ref, o_ref):
    k = pl.program_id(2)

    @pl.when(k == 0)
    def _init():
        o_ref[...] = jnp.zeros_like(o_ref)

    # Hot loop: pure MXU push. Weight is pre-transposed to [K, N] so the tile
    # is lane-dense on N (no per-step transpose); int8 values in [-8, 7] cast
    # exactly to bf16; the per-tensor dequant scale is deferred to finalize.
    # The f32 output block is resident across k (index_map ignores k), so we
    # accumulate directly into it -- no separate scratch accumulator.
    # TODO(synk): int8 x int8 MXU path for v5e/v6e (gated off on v7x).
    o_ref[...] += jnp.dot(x_ref[...], qw_ref[...].astype(jnp.bfloat16),
                          preferred_element_type=jnp.float32)

    @pl.when(k == pl.num_programs(2) - 1)
    def _finalize():
        lora = jnp.dot(xa_ref[...], b_ref[...],
                       preferred_element_type=jnp.float32)
        o_ref[...] = o_ref[...] * scale_ref[0, 0] + bias_ref[...] + lora


def qlora_linear(x, params, *, tm=512, tn=512, tk=1024):
    """QLoRA linear forward: x [M, K] -> [M, N] fp32, using prepared params."""
    M, K = x.shape
    assert K == params["K"]
    N, Np, Kp, r_pad = params["N"], params["Np"], params["Kp"], params["r_pad"]

    # tn / tk must divide the 128-rounded constant extents so the pre-padded
    # weight / bias / LoRA operands never get re-padded per call.
    tn = _largest_aligned_divisor(Np, _round_up(tn, 128), 128)
    tk = _largest_aligned_divisor(Kp, _round_up(tk, 128), 128)
    Mp8 = _round_up(M, 8)
    tm = min(_round_up(tm, 8), Mp8)
    Mp = _round_up(M, tm)

    grid_m, grid_n, grid_k = Mp // tm, Np // tn, Kp // tk

    # Only the activation is padded / cast per call (cheap; shared by both kernels).
    x_p = _pad_cast_2d(x, Mp, Kp, jnp.bfloat16)

    # xa = x @ lora_A, hoisted out of the main (i, j, k) grid.
    xa = pl.pallas_call(
        _xa_kernel,
        out_shape=jax.ShapeDtypeStruct((Mp, r_pad), jnp.bfloat16),
        grid_spec=pltpu.PrefetchScalarGridSpec(
            num_scalar_prefetch=0,
            grid=(grid_m, grid_k),
            in_specs=[
                pl.BlockSpec((tm, tk), lambda i, k: (i, k)),
                pl.BlockSpec((tk, r_pad), lambda i, k: (k, 0)),
            ],
            out_specs=pl.BlockSpec((tm, r_pad), lambda i, k: (i, 0)),
            scratch_shapes=[pltpu.VMEM((tm, r_pad), jnp.float32)],
        ),
        compiler_params=pltpu.CompilerParams(
            dimension_semantics=("parallel", "arbitrary")),
    )(x_p, params["lora_A"])

    # Decode-style shapes (single batch tile, multi-step K): triple-buffer the
    # weight DMA so its latency hides behind the short per-step compute window.
    if grid_m == 1 and grid_k >= 2:
        w_bufs = 3
        w_spec = pl.BlockSpec((tk, tn), lambda i, j, k: (k, j),
                              pipeline_mode=pl.Buffered(3))
    else:
        w_bufs = 2
        w_spec = pl.BlockSpec((tk, tn), lambda i, j, k: (k, j))

    # VMEM budget estimate (double-buffered inputs + resident f32 output).
    est = (tm * tk * 2 * 2 + tk * tn * w_bufs + tn * 4 * 2
           + tm * r_pad * 2 * 2 + r_pad * tn * 2 * 2 + tm * tn * 4 * 2)
    vmem_limit = max(32 * 1024 * 1024, min(48 * 1024 * 1024, 2 * est))

    out_p = pl.pallas_call(
        _qlora_kernel,
        out_shape=jax.ShapeDtypeStruct((Mp, Np), jnp.float32),
        grid_spec=pltpu.PrefetchScalarGridSpec(
            num_scalar_prefetch=0,
            grid=(grid_m, grid_n, grid_k),
            in_specs=[
                pl.BlockSpec((tm, tk), lambda i, j, k: (i, k)),      # x (bf16)
                w_spec,                                              # weight [K,N] int8
                pl.BlockSpec(memory_space=pltpu.MemorySpace.SMEM),   # per-tensor scale
                pl.BlockSpec((1, tn), lambda i, j, k: (0, j)),       # bias
                pl.BlockSpec((tm, r_pad), lambda i, j, k: (i, 0)),   # xa = x @ A
                pl.BlockSpec((r_pad, tn), lambda i, j, k: (0, j)),   # (alpha/rank)*B
            ],
            out_specs=pl.BlockSpec((tm, tn), lambda i, j, k: (i, j)),
        ),
        compiler_params=pltpu.CompilerParams(
            dimension_semantics=("parallel", "parallel", "arbitrary"),
            vmem_limit_bytes=vmem_limit,
        ),
    )(x_p, params["qw_t"], params["scale"], params["bias"], xa, params["lora_B"])

    return out_p[:M, :N]


if __name__ == "__main__":
    # Small deterministic setup consistent with QLoRALinear(nn.Linear(in, out)).
    batch, in_features, out_features, rank, alpha = 32, 512, 256, 8, 16

    key = jax.random.PRNGKey(0)
    k_x, k_w, k_b, k_a, k_bb = jax.random.split(key, 5)

    # nn.Linear default init: U(-1/sqrt(in), 1/sqrt(in)) for weight and bias.
    bound = 1.0 / math.sqrt(in_features)
    base_weight = jax.random.uniform(
        k_w, (out_features, in_features), jnp.float32, -bound, bound)
    bias = jax.random.uniform(k_b, (out_features,), jnp.float32, -bound, bound)

    # lora_A kaiming-uniform-like; lora_B is zeros in the module's __init__ —
    # use a tiny non-zero init so the LoRA path is numerically exercised.
    a_bound = 1.0 / math.sqrt(rank)
    lora_A = jax.random.uniform(
        k_a, (in_features, rank), jnp.float32, -a_bound, a_bound)
    lora_B = 0.01 * jax.random.normal(k_bb, (rank, out_features), jnp.float32)

    x = jax.random.normal(k_x, (batch, in_features), jnp.float32)

    # Quantize base weight (glue, plain JAX) + one-time constant prep.
    q_weight, scale = quantize_weight(base_weight)
    params = prepare_qlora_params(q_weight, scale, bias, lora_A, lora_B,
                                  alpha=alpha, rank=rank)

    # Pure-JAX fp32 reference. bf16 MXU operands => relaxed tolerance.
    w_deq = q_weight.astype(jnp.float32) * scale
    ref = np.asarray(
        x @ w_deq.T + bias[None, :] + (x @ lora_A @ lora_B) * (alpha / rank))

    # 1) Default (large) tiles -> single-step grid at these small shapes.
    out = jax.block_until_ready(qlora_linear(x, params))
    np.testing.assert_allclose(np.asarray(out), ref, rtol=2e-2, atol=2e-2)

    # 2) Small explicit tiles -> exercises the multi-step K reduction
    #    (pl.when init/finalize) and the triple-buffered weight DMA path.
    out2 = jax.block_until_ready(qlora_linear(x, params, tm=32, tn=128, tk=128))
    np.testing.assert_allclose(np.asarray(out2), ref, rtol=2e-2, atol=2e-2)

    print("KERNEL_OK")
</pallas_src>

<mosaic_0001>
module attributes {stable_mosaic.version = 11 : i64} {
  func.func @_xa_kernel(%arg0: i32, %arg1: i32, %arg2: memref<32x512xbf16, #tpu.memory_space<vmem>>, %arg3: memref<512x128xbf16, #tpu.memory_space<vmem>>, %arg4: memref<32x128xbf16, #tpu.memory_space<vmem>>, %arg5: memref<32x128xf32, #tpu.memory_space<vmem>>) attributes {dimension_semantics = [#tpu.dimension_semantics<parallel>, #tpu.dimension_semantics<arbitrary>], iteration_bounds = array<i64: 1, 1>, scalar_prefetch = 0 : i64, scratch_operands = 1 : i64, tpu.core_type = #tpu.core_type<tc>, window_params = [{transform_indices = @transform_0, window_bounds = array<i64: 32, 512>}, {transform_indices = @transform_1, window_bounds = array<i64: 512, 128>}, {transform_indices = @transform_2, window_bounds = array<i64: 32, 128>}]} {
    %c0_i32 = arith.constant 0 : i32
    %0 = arith.cmpi eq, %arg1, %c0_i32 : i32
    %1 = arith.extui %0 : i1 to i32
    %c0_i32_0 = arith.constant 0 : i32
    %2 = arith.cmpi ne, %1, %c0_i32_0 : i32
    scf.if %2 {
      %cst_10 = arith.constant 0.000000e+00 : f32
      %12 = vector.broadcast %cst_10 : f32 to vector<32x128xf32>
      %c0_11 = arith.constant 0 : index
      %c0_12 = arith.constant 0 : index
      %13 = vector.load %arg5[%c0_11, %c0_12] : memref<32x128xf32, #tpu.memory_space<vmem>>, vector<32x128xf32>
      tpu.vector_store %arg5[%c0_11, %c0_12], %12 {strides = array<i32>} : memref<32x128xf32, #tpu.memory_space<vmem>>, vector<32x128xf32>,
    } else {
    }
    %c0 = arith.constant 0 : index
    %c0_1 = arith.constant 0 : index
    %3 = vector.load %arg5[%c0, %c0_1] : memref<32x128xf32, #tpu.memory_space<vmem>>, vector<32x128xf32>
    %c0_2 = arith.constant 0 : index
    %c0_3 = arith.constant 0 : index
    %4 = vector.load %arg2[%c0_2, %c0_3] : memref<32x512xbf16, #tpu.memory_space<vmem>>, vector<32x512xbf16>
    %c0_4 = arith.constant 0 : index
    %c0_5 = arith.constant 0 : index
    %5 = vector.load %arg3[%c0_4, %c0_5] : memref<512x128xbf16, #tpu.memory_space<vmem>>, vector<512x128xbf16>
    %cst = arith.constant dense<0.000000e+00> : vector<32x128xf32>
    %6 = tpu.matmul %4, %5, %cst {dimension_numbers = #tpu.dot_dimension_numbers<[1], [0], [0], [1], [0, 0, 1, 1], [], []>} : vector<32x512xbf16>, vector<512x128xbf16>, vector<32x128xf32> -> vector<32x128xf32>
    %7 = arith.addf %3, %6 : vector<32x128xf32>
    %c0_6 = arith.constant 0 : index
    %c0_7 = arith.constant 0 : index
    %8 = vector.load %arg5[%c0_6, %c0_7] : memref<32x128xf32, #tpu.memory_space<vmem>>, vector<32x128xf32>
    tpu.vector_store %arg5[%c0_6, %c0_7], %7 {strides = array<i32>} : memref<32x128xf32, #tpu.memory_space<vmem>>, vector<32x128xf32>,
    %c0_i32_8 = arith.constant 0 : i32
    %9 = arith.cmpi eq, %arg1, %c0_i32_8 : i32
    %10 = arith.extui %9 : i1 to i32
    %c0_i32_9 = arith.constant 0 : i32
    %11 = arith.cmpi ne, %10, %c0_i32_9 : i32
    scf.if %11 {
      %c0_10 = arith.constant 0 : index
      %c0_11 = arith.constant 0 : index
      %12 = vector.load %arg5[%c0_10, %c0_11] : memref<32x128xf32, #tpu.memory_space<vmem>>, vector<32x128xf32>
      %13 = arith.truncf %12 : vector<32x128xf32> to vector<32x128xbf16>
      %c0_12 = arith.constant 0 : index
      %c0_13 = arith.constant 0 : index
      %14 = vector.load %arg4[%c0_12, %c0_13] : memref<32x128xbf16, #tpu.memory_space<vmem>>, vector<32x128xbf16>
      tpu.vector_store %arg4[%c0_12, %c0_13], %13 {strides = array<i32>} : memref<32x128xbf16, #tpu.memory_space<vmem>>, vector<32x128xbf16>,
    } else {
    }
    return
  }
  func.func @transform_0(%arg0: i32, %arg1: i32) -> (i32, i32) {
    %c0_i32 = arith.constant 0 : i32
    return %arg0, %arg1 : i32, i32
  }
  func.func @transform_1(%arg0: i32, %arg1: i32) -> (i32, i32) {
    %c0_i32 = arith.constant 0 : i32
    %c0_i32_0 = arith.constant 0 : i32
    return %arg1, %c0_i32 : i32, i32
  }
  func.func @transform_2(%arg0: i32, %arg1: i32) -> (i32, i32) {
    %c0_i32 = arith.constant 0 : i32
    %c0_i32_0 = arith.constant 0 : i32
    return %arg0, %c0_i32 : i32, i32
  }
}

</mosaic_0001>

<llo_original>
// kernel: tpu_custom_call.1
$region0: #{tpu_custom_call.1}
  #allocation0 [shape = 'u32[]', space=smem, size = 0x4, offset = 0x4, fixed_abs, tag = 'smem constant byte address 0x4 - core index']
  #allocation1 [shape = 'u32[144,128]{1,0:T(1,128)}', space=vmem, size = 0x12000, scoped, tag = 'internal scratch']
  #allocation2 [shape = 'f32[32,128]{1,0:T(8,128)}', space=vmem, size = 0x4000, scoped, tag = 'scratch operand']
  %s0 = inlined_call_operand.hbm [shape: bf16[32,512], index: 0, kind: input, shape index: {}]
  %s1 = inlined_call_operand.hbm [shape: bf16[512,128], index: 1, kind: input, shape index: {}]
  %s2 = inlined_call_operand.hbm [shape: bf16[32,128], index: 2, kind: output, shape index: {}]
  %s3 = sld [smem:[#allocation0]]
  $region34: #{tpu_custom_call.1} parent=0
    _
  %s5 = ssub.s32 1, %s3
  %s6 = scalar_select 0, %s5, %s3
  $region1: #{tpu_custom_call.1} parent=0
    #allocation3 [shape = 'u8[32768]{0}', space=vmem, size = 0x8000, scoped, tag = 'input window, operand 0, single buffered']
    #allocation4 [shape = 's32[1]{0}', space=sflag, size = 0x4, scoped, tag = 'scoped memory for tpu_custom_call.1']
    #allocation5 [shape = 's32[1]{0}', space=sflag, size = 0x4, scoped, tag = 'scoped memory for tpu_custom_call.1']
    #allocation6 [shape = 'u8[131072]{0}', space=vmem, size = 0x20000, scoped, tag = 'input window, operand 1, single buffered']
    #allocation7 [shape = 's32[1]{0}', space=sflag, size = 0x4, scoped, tag = 'scoped memory for tpu_custom_call.1']
    #allocation8 [shape = 'u8[8192]{0}', space=vmem, size = 0x2000, scoped, tag = 'output window, operand 0, single buffered']
    %7 = vsyncpa [#allocation4], 0
    %8 = vsyncpa [#allocation7], 0
    %9 = vsyncpa [#allocation5], 0
    // Predicated region
    $region2: #{tpu_custom_call.1} parent=1 // pred_check
      _
    $region3: #{tpu_custom_call.1} parent=1 // pred_check_branch
      %11 = sbr.rel (0) target = $region5
    $region4: #{tpu_custom_call.1} parent=1 // pred_region
      %s13 = ssub.s32 1024, 1024
      %14 = vsyncadd [#allocation4], %s13
      %s15 = sshll.u32 [#allocation3], 4
      %s16 = int_to_ptr.vmem [resolvable:$true] %s15
      %21 = dma.hbm_to_vmem [thread:$0]  %s0, 1024, %s16, [#allocation4], 256, 256, 16
    $region5: #{tpu_custom_call.1} parent=1 // pred_fallthru
      _
    // Predicated region
    $region6: #{tpu_custom_call.1} parent=1 // pred_check
      _
    $region7: #{tpu_custom_call.1} parent=1 // pred_check_branch
      %23 = sbr.rel (0) target = $region9
    $region8: #{tpu_custom_call.1} parent=1 // pred_region
      %s25 = ssub.s32 4096, 4096
      %26 = vsyncadd [#allocation7], %s25
      %s27 = sshll.u32 [#allocation6], 4
      %s28 = int_to_ptr.vmem [resolvable:$true] %s27
      %33 = dma.hbm_to_vmem [thread:$0]  %s1, 4096, %s28, [#allocation7], 64, 64, 4
    $region9: #{tpu_custom_call.1} parent=1 // pred_fallthru
      _
    // Predicated region
    $region10: #{tpu_custom_call.1} parent=1 // pred_check
      _
    $region11: #{tpu_custom_call.1} parent=1 // pred_check_branch
      %35 = sbr.rel (0) target = $region13
    $region12: #{tpu_custom_call.1} parent=1 // pred_region
      %36 = dma.done [#allocation4], 1024
    $region13: #{tpu_custom_call.1} parent=1 // pred_fallthru
      _
    // Predicated region
    $region14: #{tpu_custom_call.1} parent=1 // pred_check
      _
    $region15: #{tpu_custom_call.1} parent=1 // pred_check_branch
      %38 = sbr.rel (0) target = $region17
    $region16: #{tpu_custom_call.1} parent=1 // pred_region
      %39 = dma.done [#allocation7], 4096
    $region17: #{tpu_custom_call.1} parent=1 // pred_fallthru
      _
    %p41 = scmp.eq.s32.totalorder 0, 0
    // Predicated region
    $region18: #{tpu_custom_call.1} parent=1 // pred_check
      %p42 = pneg %p41
    $region19: #{tpu_custom_call.1} parent=1 // pred_check_branch
      %44 = sbr.rel (%p42) target = $region21
    $region20: #{tpu_custom_call.1} parent=1 // pred_region
      %45 = vst [vmem:[#allocation2] sm:$0xff] 0.0
      %46 = vst [vmem:[#allocation2 + $0x8] sm:$0xff] 0.0
      %47 = vst [vmem:[#allocation2 + $0x10] sm:$0xff] 0.0
      %48 = vst [vmem:[#allocation2 + $0x18] sm:$0xff] 0.0
    $region21: #{tpu_custom_call.1} parent=1 // pred_fallthru
      _
    %v49 = vld [vmem:[#allocation2] sm:$0xff]
    %v50 = vld [vmem:[#allocation2 + $0x8] sm:$0xff]
    %v51 = vld [vmem:[#allocation2 + $0x10] sm:$0xff]
    %v52 = vld [vmem:[#allocation2 + $0x18] sm:$0xff]
    %v53 = vld [vmem:[#allocation3] sm:$0xff]
    %v54 = vld [vmem:[#allocation3 + $0x8] sm:$0xff]
    %v55 = vld [vmem:[#allocation3 + $0x10] sm:$0xff]
    %v56 = vld [vmem:[#allocation3 + $0x18] sm:$0xff]
    %v57 = vld [vmem:[#allocation3 + $0x20] sm:$0xff]
    %v58 = vld [vmem:[#allocation3 + $0x28] sm:$0xff]
    %v59 = vld [vmem:[#allocation3 + $0x30] sm:$0xff]
    %v60 = vld [vmem:[#allocation3 + $0x38] sm:$0xff]
    %v61 = vld [vmem:[#allocation6] sm:$0xf]
    %v62 = vld [vmem:[#allocation6 + $0x4] sm:$0xf]
    %v63 = vld [vmem:[#allocation6 + $0x8] sm:$0xf]
    %v64 = vld [vmem:[#allocation6 + $0xc] sm:$0xf]
    %v65 = vld [vmem:[#allocation6 + $0x10] sm:$0xf]
    %v66 = vld [vmem:[#allocation6 + $0x14] sm:$0xf]
    %v67 = vld [vmem:[#allocation6 + $0x18] sm:$0xf]
    %v68 = vld [vmem:[#allocation6 + $0x1c] sm:$0xf]
    %v69 = vld [vmem:[#allocation6 + $0x20] sm:$0xf]
    %v70 = vld [vmem:[#allocation6 + $0x24] sm:$0xf]
    %v71 = vld [vmem:[#allocation6 + $0x28] sm:$0xf]
    %v72 = vld [vmem:[#allocation6 + $0x2c] sm:$0xf]
    %v73 = vld [vmem:[#allocation6 + $0x30] sm:$0xf]
    %v74 = vld [vmem:[#allocation6 + $0x34] sm:$0xf]
    %v75 = vld [vmem:[#allocation6 + $0x38] sm:$0xf]
    %v76 = vld [vmem:[#allocation6 + $0x3c] sm:$0xf]
    %v77 = vld [vmem:[#allocation6 + $0x40] sm:$0xf]
    %v78 = vld [vmem:[#allocation6 + $0x44] sm:$0xf]
    %v79 = vld [vmem:[#allocation6 + $0x48] sm:$0xf]
    %v80 = vld [vmem:[#allocation6 + $0x4c] sm:$0xf]
    %v81 = vld [vmem:[#allocation6 + $0x50] sm:$0xf]
    %v82 = vld [vmem:[#allocation6 + $0x54] sm:$0xf]
    %v83 = vld [vmem:[#allocation6 + $0x58] sm:$0xf]
    %v84 = vld [vmem:[#allocation6 + $0x5c] sm:$0xf]
    %v85 = vld [vmem:[#allocation6 + $0x60] sm:$0xf]
    %v86 = vld [vmem:[#allocation6 + $0x64] sm:$0xf]
    %v87 = vld [vmem:[#allocation6 + $0x68] sm:$0xf]
    %v88 = vld [vmem:[#allocation6 + $0x6c] sm:$0xf]
    %v89 = vld [vmem:[#allocation6 + $0x70] sm:$0xf]
    %v90 = vld [vmem:[#allocation6 + $0x74] sm:$0xf]
    %v91 = vld [vmem:[#allocation6 + $0x78] sm:$0xf]
    %v92 = vld [vmem:[#allocation6 + $0x7c] sm:$0xf]
    %v93 = vld [vmem:[#allocation6 + $0x80] sm:$0xf]
    %v94 = vld [vmem:[#allocation6 + $0x84] sm:$0xf]
    %v95 = vld [vmem:[#allocation6 + $0x88] sm:$0xf]
    %v96 = vld [vmem:[#allocation6 + $0x8c] sm:$0xf]
    %v97 = vld [vmem:[#allocation6 + $0x90] sm:$0xf]
    %v98 = vld [vmem:[#allocation6 + $0x94] sm:$0xf]
    %v99 = vld [vmem:[#allocation6 + $0x98] sm:$0xf]
    %v100 = vld [vmem:[#allocation6 + $0x9c] sm:$0xf]
    %v101 = vld [vmem:[#allocation6 + $0xa0] sm:$0xf]
    %v102 = vld [vmem:[#allocation6 + $0xa4] sm:$0xf]
    %v103 = vld [vmem:[#allocation6 + $0xa8] sm:$0xf]
    %v104 = vld [vmem:[#allocation6 + $0xac] sm:$0xf]
    %v105 = vld [vmem:[#allocation6 + $0xb0] sm:$0xf]
    %v106 = vld [vmem:[#allocation6 + $0xb4] sm:$0xf]
    %v107 = vld [vmem:[#allocation6 + $0xb8] sm:$0xf]
    %v108 = vld [vmem:[#allocation6 + $0xbc] sm:$0xf]
    %v109 = vld [vmem:[#allocation6 + $0xc0] sm:$0xf]
    %v110 = vld [vmem:[#allocation6 + $0xc4] sm:$0xf]
    %v111 = vld [vmem:[#allocation6 + $0xc8] sm:$0xf]
    %v112 = vld [vmem:[#allocation6 + $0xcc] sm:$0xf]
    %v113 = vld [vmem:[#allocation6 + $0xd0] sm:$0xf]
    %v114 = vld [vmem:[#allocation6 + $0xd4] sm:$0xf]
    %v115 = vld [vmem:[#allocation6 + $0xd8] sm:$0xf]
    %v116 = vld [vmem:[#allocation6 + $0xdc] sm:$0xf]
    %v117 = vld [vmem:[#allocation6 + $0xe0] sm:$0xf]
    %v118 = vld [vmem:[#allocation6 + $0xe4] sm:$0xf]
    %v119 = vld [vmem:[#allocation6 + $0xe8] sm:$0xf]
    %v120 = vld [vmem:[#allocation6 + $0xec] sm:$0xf]
    %v121 = vld [vmem:[#allocation6 + $0xf0] sm:$0xf]
    %v122 = vld [vmem:[#allocation6 + $0xf4] sm:$0xf]
    %v123 = vld [vmem:[#allocation6 + $0xf8] sm:$0xf]
    %v124 = vld [vmem:[#allocation6 + $0xfc] sm:$0xf]
    %v133 = vunpack.c.l.b16 %v53
    %v134 = vunpack.c.h.b16 %v53
    %v135 = vunpack.c.l.b16 %v54
    %v136 = vunpack.c.h.b16 %v54
    %v137 = vunpack.c.l.b16 %v55
    %v138 = vunpack.c.h.b16 %v55
    %v139 = vunpack.c.l.b16 %v56
    %v140 = vunpack.c.h.b16 %v56
    %v141 = vunpack.c.l.b16 %v57
    %v142 = vunpack.c.h.b16 %v57
    %v143 = vunpack.c.l.b16 %v58
    %v144 = vunpack.c.h.b16 %v58
    %v145 = vunpack.c.l.b16 %v59
    %v146 = vunpack.c.h.b16 %v59
    %v147 = vunpack.c.l.b16 %v60
    %v148 = vunpack.c.h.b16 %v60
    %v149 = vpack.c.b16 %v137, %v133
    %v150 = vpack.c.b16 %v138, %v134
    %v151 = vpack.c.b16 %v139, %v135
    %v152 = vpack.c.b16 %v140, %v136
    %v153 = vpack.c.b16 %v145, %v141
    %v154 = vpack.c.b16 %v146, %v142
    %v155 = vpack.c.b16 %v147, %v143
    %v156 = vpack.c.b16 %v148, %v144
    %v229 = vunpack.c.l.b16 %v61
    %v230 = vunpack.c.l.b16 %v62
    %v231 = vunpack.c.l.b16 %v63
    %v232 = vunpack.c.l.b16 %v64
    %v233 = vunpack.c.l.b16 %v65
    %v234 = vunpack.c.l.b16 %v66
    %v235 = vunpack.c.l.b16 %v67
    %v236 = vunpack.c.l.b16 %v68
    %v237 = vunpack.c.l.b16 %v69
    %v238 = vunpack.c.l.b16 %v70
    %v239 = vunpack.c.l.b16 %v71
    %v240 = vunpack.c.l.b16 %v72
    %v241 = vunpack.c.l.b16 %v73
    %v242 = vunpack.c.l.b16 %v74
    %v243 = vunpack.c.l.b16 %v75
    %v244 = vunpack.c.l.b16 %v76
    %v245 = vunpack.c.l.b16 %v77
    %v246 = vunpack.c.l.b16 %v78
    %v247 = vunpack.c.l.b16 %v79
    %v248 = vunpack.c.l.b16 %v80
    %v249 = vunpack.c.l.b16 %v81
    %v250 = vunpack.c.l.b16 %v82
    %v251 = vunpack.c.l.b16 %v83
    %v252 = vunpack.c.l.b16 %v84
    %v253 = vunpack.c.l.b16 %v85
    %v254 = vunpack.c.l.b16 %v86
    %v255 = vunpack.c.l.b16 %v87
    %v256 = vunpack.c.l.b16 %v88
    %v257 = vunpack.c.l.b16 %v89
    %v258 = vunpack.c.l.b16 %v90
    %v259 = vunpack.c.l.b16 %v91
    %v260 = vunpack.c.l.b16 %v92
    %v261 = vunpack.c.l.b16 %v93
    %v262 = vunpack.c.l.b16 %v94
    %v263 = vunpack.c.l.b16 %v95
    %v264 = vunpack.c.l.b16 %v96
    %v265 = vunpack.c.l.b16 %v97
    %v266 = vunpack.c.l.b16 %v98
    %v267 = vunpack.c.l.b16 %v99
    %v268 = vunpack.c.l.b16 %v100
    %v269 = vunpack.c.l.b16 %v101
    %v270 = vunpack.c.l.b16 %v102
    %v271 = vunpack.c.l.b16 %v103
    %v272 = vunpack.c.l.b16 %v104
    %v273 = vunpack.c.l.b16 %v105
    %v274 = vunpack.c.l.b16 %v106
    %v275 = vunpack.c.l.b16 %v107
    %v276 = vunpack.c.l.b16 %v108
    %v277 = vunpack.c.l.b16 %v109
    %v278 = vunpack.c.l.b16 %v110
    %v279 = vunpack.c.l.b16 %v111
    %v280 = vunpack.c.l.b16 %v112
    %v281 = vunpack.c.l.b16 %v113
    %v282 = vunpack.c.l.b16 %v114
    %v283 = vunpack.c.l.b16 %v115
    %v284 = vunpack.c.l.b16 %v116
    %v285 = vunpack.c.l.b16 %v117
    %v286 = vunpack.c.l.b16 %v118
    %v287 = vunpack.c.l.b16 %v119
    %v288 = vunpack.c.l.b16 %v120
    %v289 = vunpack.c.l.b16 %v121
    %v290 = vunpack.c.l.b16 %v122
    %v291 = vunpack.c.l.b16 %v123
    %v292 = vunpack.c.l.b16 %v124
    %v293 = vpack.c.b16 %v230, %v229
    %v294 = vpack.c.b16 %v232, %v231
    %v295 = vpack.c.b16 %v234, %v233
    %v296 = vpack.c.b16 %v236, %v235
    %v297 = vpack.c.b16 %v238, %v237
    %v298 = vpack.c.b16 %v240, %v239
    %v299 = vpack.c.b16 %v242, %v241
    %v300 = vpack.c.b16 %v244, %v243
    %v301 = vpack.c.b16 %v246, %v245
    %v302 = vpack.c.b16 %v248, %v247
    %v303 = vpack.c.b16 %v250, %v249
    %v304 = vpack.c.b16 %v252, %v251
    %v305 = vpack.c.b16 %v254, %v253
    %v306 = vpack.c.b16 %v256, %v255
    %v307 = vpack.c.b16 %v258, %v257
    %v308 = vpack.c.b16 %v260, %v259
    %v309 = vpack.c.b16 %v262, %v261
    %v310 = vpack.c.b16 %v264, %v263
    %v311 = vpack.c.b16 %v266, %v265
    %v312 = vpack.c.b16 %v268, %v267
    %v313 = vpack.c.b16 %v270, %v269
    %v314 = vpack.c.b16 %v272, %v271
    %v315 = vpack.c.b16 %v274, %v273
    %v316 = vpack.c.b16 %v276, %v275
    %v317 = vpack.c.b16 %v278, %v277
    %v318 = vpack.c.b16 %v280, %v279
    %v319 = vpack.c.b16 %v282, %v281
    %v320 = vpack.c.b16 %v284, %v283
    %v321 = vpack.c.b16 %v286, %v285
    %v322 = vpack.c.b16 %v288, %v287
    %v323 = vpack.c.b16 %v290, %v289
    %v324 = vpack.c.b16 %v292, %v291
    %357 = vmatprep.subr.bf16.mxu0 0
    %358 = vmatpush1.bf16.msra.mxu0 %v293
    %359 = vmatprep.subr.bf16.mxu0 0
    %360 = vmatpush1.bf16.msra.mxu0 %v294
    %361 = vmatprep.subr.bf16.mxu0 0
    %362 = vmatpush1.bf16.msra.mxu0 %v295
    %363 = vmatprep.subr.bf16.mxu0 0
    %364 = vmatpush1.bf16.msra.mxu0 %v296
    %365 = vmatprep.subr.bf16.mxu0 0
    %366 = vmatpush1.bf16.msra.mxu0 %v297
    %367 = vmatprep.subr.bf16.mxu0 0
    %368 = vmatpush1.bf16.msra.mxu0 %v298
    %369 = vmatprep.subr.bf16.mxu0 0
    %370 = vmatpush1.bf16.msra.mxu0 %v299
    %371 = vmatprep.subr.bf16.mxu0 0
    %372 = vmatpush1.bf16.msra.mxu0 %v300
    %373 = vmatprep.subr.bf16.mxu0 0
    %374 = vmatpush1.bf16.msra.mxu0 %v301
    %375 = vmatprep.subr.bf16.mxu0 0
    %376 = vmatpush1.bf16.msra.mxu0 %v302
    %377 = vmatprep.subr.bf16.mxu0 0
    %378 = vmatpush1.bf16.msra.mxu0 %v303
    %379 = vmatprep.subr.bf16.mxu0 0
    %380 = vmatpush1.bf16.msra.mxu0 %v304
    %381 = vmatprep.subr.bf16.mxu0 0
    %382 = vmatpush1.bf16.msra.mxu0 %v305
    %383 = vmatprep.subr.bf16.mxu0 0
    %384 = vmatpush1.bf16.msra.mxu0 %v306
    %385 = vmatprep.subr.bf16.mxu0 0
    %386 = vmatpush1.bf16.msra.mxu0 %v307
    %387 = vmatprep.subr.bf16.mxu0 0
    %388 = vmatpush1.bf16.msra.mxu0 %v308
    %389 = vmatprep.mubr.bf16.mxu0 %v150
    %390 = vmatmul.mubr.bf16.gmra.mrb[0].mxu0 %v149
    %v391 = vpop.f32.mrb[0].mxu0
    %v392 = vadd.f32 0.0, %v391
    %v393 = vpop.f32.mrb[0].mxu0
    %v394 = vpop.f32.mrb[0].mxu0
    %v395 = vadd.f32 0.0, %v394
    %v396 = vpop.f32.mrb[0].mxu0
    %397 = vmatprep.mubr.bf16.mxu0 %v154
    %398 = vmatmul.mubr.bf16.gmra.mrb[0].mxu0 %v153
    %v399 = vpop.f32.mrb[0].mxu0
    %v400 = vadd.f32 0.0, %v399
    %v401 = vpop.f32.mrb[0].mxu0
    %v402 = vpop.f32.mrb[0].mxu0
    %v403 = vadd.f32 0.0, %v402
    %v404 = vpop.f32.mrb[0].mxu0
    %405 = vdwg.mxu0
    %406 = vmatprep.subr.bf16.mxu0 0
    %407 = vmatpush1.bf16.msra.mxu0 %v309
    %408 = vmatprep.subr.bf16.mxu0 0
    %409 = vmatpush1.bf16.msra.mxu0 %v310
    %410 = vmatprep.subr.bf16.mxu0 0
    %411 = vmatpush1.bf16.msra.mxu0 %v311
    %412 = vmatprep.subr.bf16.mxu0 0
    %413 = vmatpush1.bf16.msra.mxu0 %v312
    %414 = vmatprep.subr.bf16.mxu0 0
    %415 = vmatpush1.bf16.msra.mxu0 %v313
    %416 = vmatprep.subr.bf16.mxu0 0
    %417 = vmatpush1.bf16.msra.mxu0 %v314
    %418 = vmatprep.subr.bf16.mxu0 0
    %419 = vmatpush1.bf16.msra.mxu0 %v315
    %420 = vmatprep.subr.bf16.mxu0 0
    %421 = vmatpush1.bf16.msra.mxu0 %v316
    %422 = vmatprep.subr.bf16.mxu0 0
    %423 = vmatpush1.bf16.msra.mxu0 %v317
    %424 = vmatprep.subr.bf16.mxu0 0
    %425 = vmatpush1.bf16.msra.mxu0 %v318
    %426 = vmatprep.subr.bf16.mxu0 0
    %427 = vmatpush1.bf16.msra.mxu0 %v319
    %428 = vmatprep.subr.bf16.mxu0 0
    %429 = vmatpush1.bf16.msra.mxu0 %v320
    %430 = vmatprep.subr.bf16.mxu0 0
    %431 = vmatpush1.bf16.msra.mxu0 %v321
    %432 = vmatprep.subr.bf16.mxu0 0
    %433 = vmatpush1.bf16.msra.mxu0 %v322
    %434 = vmatprep.subr.bf16.mxu0 0
    %435 = vmatpush1.bf16.msra.mxu0 %v323
    %436 = vmatprep.subr.bf16.mxu0 0
    %437 = vmatpush1.bf16.msra.mxu0 %v324
    %438 = vmatprep.mubr.bf16.mxu0 %v152
    %439 = vmatmul.mubr.bf16.gmra.mrb[0].mxu0 %v151
    %v440 = vpop.f32.mrb[0].mxu0
    %v441 = vadd.f32 %v392, %v440
    %v442 = vpop.f32.mrb[0].mxu0
    %v443 = vpop.f32.mrb[0].mxu0
    %v444 = vadd.f32 %v395, %v443
    %v445 = vpop.f32.mrb[0].mxu0
    %446 = vmatprep.mubr.bf16.mxu0 %v156
    %447 = vmatmul.mubr.bf16.gmra.mrb[0].mxu0 %v155
    %v448 = vpop.f32.mrb[0].mxu0
    %v449 = vadd.f32 %v400, %v448
    %v450 = vpop.f32.mrb[0].mxu0
    %v451 = vpop.f32.mrb[0].mxu0
    %v452 = vadd.f32 %v403, %v451
    %v453 = vpop.f32.mrb[0].mxu0
    %454 = vdwg.mxu0
    %v455 = vadd.f32 %v49, %v441
    %v456 = vadd.f32 %v50, %v444
    %v457 = vadd.f32 %v51, %v449
    %v458 = vadd.f32 %v52, %v452
    %459 = vst [vmem:[#allocation2] sm:$0xff] %v455
    %460 = vst [vmem:[#allocation2 + $0x8] sm:$0xff] %v456
    %461 = vst [vmem:[#allocation2 + $0x10] sm:$0xff] %v457
    %462 = vst [vmem:[#allocation2 + $0x18] sm:$0xff] %v458
    // Predicated region
    $region22: #{tpu_custom_call.1} parent=1 // pred_check
      %p463 = pneg %p41
    $region23: #{tpu_custom_call.1} parent=1 // pred_check_branch
      %465 = sbr.rel (%p463) target = $region25
    $region24: #{tpu_custom_call.1} parent=1 // pred_region
      %v466 = vld [vmem:[#allocation2] sm:$0xff]
      %v467 = vld [vmem:[#allocation2 + $0x8] sm:$0xff]
      %v468 = vld [vmem:[#allocation2 + $0x10] sm:$0xff]
      %v469 = vld [vmem:[#allocation2 + $0x18] sm:$0xff]
      %v470 = vpack.c.bf16 %v467, %v466
      %v471 = vpack.c.bf16 %v469, %v468
      %v474 = vunpack.c.l.b16 %v470
      %v475 = vunpack.c.h.b16 %v470
      %v476 = vunpack.c.l.b16 %v471
      %v477 = vunpack.c.h.b16 %v471
      %v478 = vpack.c.b16 %v474, %v474
      %v479 = vpack.c.b16 %v475, %v475
      %v480 = vpack.c.b16 %v476, %v476
      %v481 = vpack.c.b16 %v477, %v477
      %486 = vst [vmem:[#allocation8] sm:$0xf] %v478
      %487 = vst [vmem:[#allocation8 + $0x4] sm:$0xf] %v479
      %488 = vst [vmem:[#allocation8 + $0x8] sm:$0xf] %v480
      %489 = vst [vmem:[#allocation8 + $0xc] sm:$0xf] %v481
    $region25: #{tpu_custom_call.1} parent=1 // pred_fallthru
      _
    // Predicated region
    $region26: #{tpu_custom_call.1} parent=1 // pred_check
      _
    $region27: #{tpu_custom_call.1} parent=1 // pred_check_branch
      %491 = sbr.rel (0) target = $region29
    $region28: #{tpu_custom_call.1} parent=1 // pred_region
      %s493 = ssub.s32 256, 256
      %494 = vsyncadd [#allocation5], %s493
      %s495 = sshll.u32 [#allocation8], 4
      %s496 = int_to_ptr.vmem [resolvable:$true] %s495
      %501 = dma.vmem_to_hbm [thread:$0]  %s496, 256, %s2, [#allocation5], 64, 64, 4
    $region29: #{tpu_custom_call.1} parent=1 // pred_fallthru
      _
    // Predicated region
    $region30: #{tpu_custom_call.1} parent=1 // pred_check
      _
    $region31: #{tpu_custom_call.1} parent=1 // pred_check_branch
      %503 = sbr.rel (0) target = $region33
    $region32: #{tpu_custom_call.1} parent=1 // pred_region
      %504 = dma.done [#allocation5], 256
    $region33: #{tpu_custom_call.1} parent=1 // pred_fallthru
      _
    %505 = vsyncpa [#allocation4], 1
    %506 = vsyncpa [#allocation7], 1
    %507 = vsyncpa [#allocation5], 1

</llo_original>
